<compile_context>
chip_gen: v7x
topology: tpu7x:2x2x1
jax: 0.10.0
libtpu: 0.0.40
codegen_flags: <defaults>
</compile_context>

<pallas_src>
import functools
import math

import jax
import jax.numpy as jnp
from jax.experimental import pallas as pl
from jax.experimental.pallas import tpu as pltpu


def _avg_l1_norm_kernel(x_ref, o_ref, *, eps, inv_d, keep_native):
    """One (tile_b, D) block: row / clamp(mean(|row|, -1), eps)."""
    if keep_native:
        # 16-bit float input: keep the store path in the native dtype (halves
        # intermediate vreg/VMEM pressure); the reduction still runs in f32.
        x = x_ref[...]
        abs_f32 = jnp.abs(x).astype(jnp.float32)
    else:
        x = x_ref[...].astype(jnp.float32)
        abs_f32 = jnp.abs(x)
    sum_abs = jnp.sum(abs_f32, axis=-1, keepdims=True)   # XLU reduce over logical D
    denom = jnp.maximum(sum_abs * inv_d, eps)             # .clamp(min=eps)
    inv = pl.reciprocal(denom, approx=True)               # EUP slot (otherwise idle)
    inv = inv * (2.0 - denom * inv)                       # one Newton step -> f32-exact, free
    o_ref[...] = (x * inv.astype(x.dtype)).astype(o_ref.dtype)


def _round_up(n, m):
    return ((n + m - 1) // m) * m


def avg_l1_norm(x, eps=1e-8, tile_b=None):
    """x[..., D] -> x / mean(|x|, -1, keepdim=True).clamp(min=eps)."""
    orig_shape = x.shape
    D = int(orig_shape[-1])
    B = int(math.prod(orig_shape[:-1]))  # collapse leading dims (metadata-only, no copy)
    x2 = x.reshape(B, D)

    itemsize = jnp.dtype(x.dtype).itemsize
    sublane = {4: 8, 2: 16, 1: 32}.get(itemsize, 8)
    is_float = jnp.issubdtype(x.dtype, jnp.floating)
    out_dtype = x.dtype if is_float else jnp.float32      # PyTorch division promotes ints
    out_itemsize = jnp.dtype(out_dtype).itemsize
    keep_native = is_float and itemsize == 2

    CAP_ROWS = 512                 # 512-row lane-dense tiles already ~85% of HBM roofline
    VMEM_TILE_BUDGET = 24 << 20    # total tile-buffer target (safe on v7x 64 MiB/TC)

    # Per-row VMEM cost: double-buffered input + output blocks plus one f32 intermediate.
    per_row = D * (2 * itemsize + 2 * out_itemsize + 4)
    if sublane * per_row > (40 << 20):
        # TODO(synk): add a feature-axis ("arbitrary") grid with a row-sum accumulator
        # and a second scaling pass for very large D instead of raising.
        raise NotImplementedError(f"feature dim {D} too large for single-pass VMEM tiling")
    rows_fit = max(sublane, (VMEM_TILE_BUDGET // per_row) // sublane * sublane)

    if tile_b is None:
        # >=2 grid steps whenever B allows it (v7x: both TensorCores busy),
        # <=CAP_ROWS rows per step, and fit the VMEM tile budget.
        steps = max(2 if B > sublane else 1, pl.cdiv(B, CAP_ROWS))
        tile_b = _round_up(pl.cdiv(B, steps), sublane)
        tile_b = max(sublane, min(tile_b, CAP_ROWS, rows_fit))
    assert tile_b % sublane == 0 and tile_b >= sublane

    num_blocks = pl.cdiv(B, tile_b)   # partial last block: OOB rows dropped on writeback
    vmem_limit = int(max(16 << 20, min(tile_b * per_row + (8 << 20), 56 << 20)))

    kernel = functools.partial(_avg_l1_norm_kernel, eps=float(eps),
                               inv_d=1.0 / float(D), keep_native=keep_native)

    out = pl.pallas_call(
        kernel,
        out_shape=jax.ShapeDtypeStruct((B, D), out_dtype),
        grid_spec=pltpu.PrefetchScalarGridSpec(
            num_scalar_prefetch=0,
            grid=(num_blocks,),
            in_specs=[pl.BlockSpec((tile_b, D), lambda i: (i, 0))],
            out_specs=pl.BlockSpec((tile_b, D), lambda i: (i, 0)),
        ),
        compiler_params=pltpu.CompilerParams(
            dimension_semantics=("parallel",),   # v7x: shard batch grid across both TCs
            vmem_limit_bytes=vmem_limit,
        ),
        cost_estimate=pl.CostEstimate(
            flops=3 * B * D,
            transcendentals=B,
            bytes_accessed=B * D * (itemsize + out_itemsize),
        ),
    )(x2)

    return out.reshape(orig_shape[:-1] + (D,))


if __name__ == "__main__":
    key = jax.random.PRNGKey(0)

    def _ref(x, eps=1e-8):
        return x / jnp.maximum(jnp.mean(jnp.abs(x), axis=-1, keepdims=True), eps)

    k1, k2, k3 = jax.random.split(key, 3)

    # Small shape consistent with the module (batch of feature vectors).
    x1 = jax.random.normal(k1, (8, 32), dtype=jnp.float32)
    out1 = jax.block_until_ready(avg_l1_norm(x1))
    assert out1.shape == x1.shape and out1.dtype == x1.dtype
    assert jnp.allclose(out1, _ref(x1), rtol=1e-4, atol=1e-5)

    # Unaligned batch & features: full-D block + partial last batch block, no pad/slice.
    x2 = jax.random.normal(k2, (5, 48), dtype=jnp.float32)
    out2 = jax.block_until_ready(avg_l1_norm(x2))
    assert out2.shape == x2.shape and out2.dtype == x2.dtype
    assert jnp.allclose(out2, _ref(x2), rtol=1e-4, atol=1e-5)

    # 3-D bf16 input: leading dims collapsed in the wrapper, native-dtype store path.
    x3 = jax.random.normal(k3, (2, 9, 40), dtype=jnp.bfloat16)
    out3 = jax.block_until_ready(avg_l1_norm(x3))
    assert out3.shape == x3.shape and out3.dtype == x3.dtype
    assert jnp.allclose(out3.astype(jnp.float32), _ref(x3.astype(jnp.float32)),
                        rtol=2e-2, atol=2e-2)

    print("KERNEL_OK")
</pallas_src>

<mosaic_0001>
module attributes {stable_mosaic.version = 11 : i64} {
  func.func @_avg_l1_norm_kernel(%arg0: i32, %arg1: memref<8x32xf32, #tpu.memory_space<vmem>>, %arg2: memref<8x32xf32, #tpu.memory_space<vmem>>) attributes {dimension_semantics = [#tpu.dimension_semantics<parallel>], iteration_bounds = array<i64: 1>, scalar_prefetch = 0 : i64, scratch_operands = 0 : i64, tpu.core_type = #tpu.core_type<tc>, window_params = [{transform_indices = @transform_0, window_bounds = array<i64: 8, 32>}, {transform_indices = @transform_1, window_bounds = array<i64: 8, 32>}]} {
    %c0 = arith.constant 0 : index
    %c0_0 = arith.constant 0 : index
    %0 = vector.load %arg1[%c0, %c0_0] : memref<8x32xf32, #tpu.memory_space<vmem>>, vector<8x32xf32>
    %1 = math.absf %0 : vector<8x32xf32>
    %cst = arith.constant dense<0.000000e+00> : vector<8xf32>
    %2 = vector.multi_reduction <add>, %1, %cst [1] : vector<8x32xf32> to vector<8xf32>
    %3 = vector.shape_cast %2 : vector<8xf32> to vector<8x1xf32>
    %cst_1 = arith.constant 3.125000e-02 : f32
    %4 = vector.broadcast %cst_1 : f32 to vector<8x1xf32>
    %5 = arith.mulf %3, %4 : vector<8x1xf32>
    %cst_2 = arith.constant 9.99999993E-9 : f32
    %6 = vector.broadcast %cst_2 : f32 to vector<8x1xf32>
    %7 = arith.maximumf %5, %6 : vector<8x1xf32>
    %8 = tpu.reciprocal %7 {approx = true} : vector<8x1xf32> -> vector<8x1xf32>
    %9 = arith.mulf %7, %8 : vector<8x1xf32>
    %cst_3 = arith.constant 2.000000e+00 : f32
    %10 = vector.broadcast %cst_3 : f32 to vector<8x1xf32>
    %11 = arith.subf %10, %9 : vector<8x1xf32>
    %12 = arith.mulf %8, %11 : vector<8x1xf32>
    %13 = vector.broadcast %12 : vector<8x1xf32> to vector<8x32xf32>
    %14 = arith.mulf %0, %13 : vector<8x32xf32>
    %c0_4 = arith.constant 0 : index
    %c0_5 = arith.constant 0 : index
    %15 = vector.load %arg2[%c0_4, %c0_5] : memref<8x32xf32, #tpu.memory_space<vmem>>, vector<8x32xf32>
    tpu.vector_store %arg2[%c0_4, %c0_5], %14 {strides = array<i32>} : memref<8x32xf32, #tpu.memory_space<vmem>>, vector<8x32xf32>,
    return
  }
  func.func @transform_0(%arg0: i32) -> (i32, i32) {
    %c0_i32 = arith.constant 0 : i32
    %c0_i32_0 = arith.constant 0 : i32
    return %arg0, %c0_i32 : i32, i32
  }
  func.func @transform_1(%arg0: i32) -> (i32, i32) {
    %c0_i32 = arith.constant 0 : i32
    %c0_i32_0 = arith.constant 0 : i32
    return %arg0, %c0_i32 : i32, i32
  }
}

</mosaic_0001>

<llo_original>
// kernel: tpu_custom_call.1
$region0: #{tpu_custom_call.1}
  #allocation0 [shape = 'u32[]', space=smem, size = 0x4, offset = 0x4, fixed_abs, tag = 'smem constant byte address 0x4 - core index']
  #allocation1 [shape = 'u32[144,128]{1,0:T(1,128)}', space=vmem, size = 0x12000, scoped, tag = 'internal scratch']
  %s0 = inlined_call_operand.hbm [shape: f32[8,32], index: 0, kind: input, shape index: {}]
  %s1 = inlined_call_operand.hbm [shape: f32[8,32], index: 1, kind: output, shape index: {}]
  %s2 = sld [smem:[#allocation0]]
  $region18: #{tpu_custom_call.1} parent=0
    _
  %s4 = ssub.s32 1, %s2
  %s5 = scalar_select 0, %s4, %s2
  $region1: #{tpu_custom_call.1} parent=0
    #allocation2 [shape = 'u8[4096]{0}', space=vmem, size = 0x1000, scoped, tag = 'input window, operand 0, single buffered']
    #allocation3 [shape = 's32[1]{0}', space=sflag, size = 0x4, scoped, tag = 'scoped memory for tpu_custom_call.1']
    #allocation4 [shape = 's32[1]{0}', space=sflag, size = 0x4, scoped, tag = 'scoped memory for tpu_custom_call.1']
    #allocation5 [shape = 'u8[4096]{0}', space=vmem, size = 0x1000, scoped, tag = 'output window, operand 0, single buffered']
    %6 = vsyncpa [#allocation3], 0
    %7 = vsyncpa [#allocation4], 0
    // Predicated region
    $region2: #{tpu_custom_call.1} parent=1 // pred_check
      _
    $region3: #{tpu_custom_call.1} parent=1 // pred_check_branch
      %9 = sbr.rel (0) target = $region5
    $region4: #{tpu_custom_call.1} parent=1 // pred_region
      %s11 = ssub.s32 128, 128
      %12 = vsyncadd [#allocation3], %s11
      %s14 = sshll.u32 [#allocation2], 4
      %s15 = int_to_ptr.vmem [resolvable:$true] %s14
      %17 = dma.hbm_to_vmem [thread:$0]  %s0, 128, %s15, [#allocation3]
    $region5: #{tpu_custom_call.1} parent=1 // pred_fallthru
      _
    // Predicated region
    $region6: #{tpu_custom_call.1} parent=1 // pred_check
      _
    $region7: #{tpu_custom_call.1} parent=1 // pred_check_branch
      %19 = sbr.rel (0) target = $region9
    $region8: #{tpu_custom_call.1} parent=1 // pred_region
      %20 = dma.done [#allocation3], 128
    $region9: #{tpu_custom_call.1} parent=1 // pred_fallthru
      _
    %v21 = vld [vmem:[#allocation2] sm:$0xff]
    %v22 = vand.u32 2147483647, %v21
    %vm23 = vcmask 261120
    %v24 = vsel %vm23, %v22, 0.0
    %25 = vadd.xlane.f32.xlu0 %v24
    %v26 = vpop.xlane.xlu0 %25
    %v27 = vmul.f32 %v26, 0.03125
    %v28 = vmax.f32 %v27, 1e-08
    %v29 = vrcp.pop %v28
    %v30 = vmul.f32 %v28, %v29
    %v31 = vsub.f32 2.0, %v30
    %v32 = vmul.f32 %v29, %v31
    %v33 = vmul.f32 %v21, %v32
    %34 = vst.msk [vmem:[#allocation5] sm:$0xff] %vm23, %v33
    // Predicated region
    $region10: #{tpu_custom_call.1} parent=1 // pred_check
      _
    $region11: #{tpu_custom_call.1} parent=1 // pred_check_branch
      %36 = sbr.rel (0) target = $region13
    $region12: #{tpu_custom_call.1} parent=1 // pred_region
      %s38 = ssub.s32 128, 128
      %39 = vsyncadd [#allocation4], %s38
      %s41 = sshll.u32 [#allocation5], 4
      %s42 = int_to_ptr.vmem [resolvable:$true] %s41
      %44 = dma.vmem_to_hbm [thread:$0]  %s42, 128, %s1, [#allocation4]
    $region13: #{tpu_custom_call.1} parent=1 // pred_fallthru
      _
    // Predicated region
    $region14: #{tpu_custom_call.1} parent=1 // pred_check
      _
    $region15: #{tpu_custom_call.1} parent=1 // pred_check_branch
      %46 = sbr.rel (0) target = $region17
    $region16: #{tpu_custom_call.1} parent=1 // pred_region
      %47 = dma.done [#allocation4], 128
    $region17: #{tpu_custom_call.1} parent=1 // pred_fallthru
      _
    %48 = vsyncpa [#allocation3], 1
    %49 = vsyncpa [#allocation4], 1

</llo_original>
